<compile_context>
chip_gen: v7x
topology: tpu7x:2x2x1
jax: 0.10.0
libtpu: 0.0.40
codegen_flags: <defaults>
</compile_context>

<pallas_src>
import functools

import jax
import jax.numpy as jnp
from jax.experimental import pallas as pl
from jax.experimental.pallas import tpu as pltpu


def sse_kernel(x_ref, wcat_ref, w2_ref, o_ref, *, C):
    x = x_ref[...]                                    # (C, thw), native dtype

    # Single fused MXU pass: rows [0:C] = residual (Wr @ x), rows [C:] = conv1 (W1 @ x).
    xm = x.astype(wcat_ref.dtype)                     # no-op if dtypes already match
    fused = jnp.dot(wcat_ref[...], xm, preferred_element_type=jnp.float32)  # (C+C//2, thw) f32

    res = fused[:C, :]                                # residual branch, f32
    h1 = jnp.maximum(fused[C:, :], 0.0)               # conv1 + ReLU, (C//2, thw) f32

    # conv2 (C//2 -> 1, no bias): 1-row matmul moved off the MXU:
    # VPU multiply with the (C//2, 1) weight column + sublane (XLU) reduction.
    z = jnp.sum(h1 * w2_ref[...], axis=0, keepdims=True)   # (1, thw) f32
    s = 1.0 / (1.0 + jnp.exp(-z))                     # sigmoid (EUP exp), exact

    # Per-pixel gate broadcasts over the channel (sublane) axis; accumulate in f32.
    o_ref[...] = (x.astype(jnp.float32) * s + res).astype(o_ref.dtype)


def _round_up(v, m):
    return ((v + m - 1) // m) * m


def _pick_hw_tile(N, HW, C, itemsize, max_tile_bytes=2 << 20):
    """Lane tile for the HW axis: a multiple of 128, sized so one x tile is
    <= max_tile_bytes.  No divisibility requirement: the grid uses cdiv and the
    runtime masks the partial last block."""
    hw_padded = _round_up(HW, 128)
    max_lanes = max(128, (max_tile_bytes // max(1, C * itemsize)) // 128 * 128)
    thw = min(hw_padded, max_lanes)
    # v7x has 2 TensorCores per chip: keep >= 2 grid steps when N == 1.
    if N == 1 and thw >= hw_padded and hw_padded > 128:
        thw = max(128, _round_up(hw_padded // 2, 128))
    return thw


def _vmem_limit_bytes(C, thw, x_itemsize, w_bytes):
    """Honest per-generation budget: 2x double-buffered in + 2x out tiles plus the
    in-kernel f32 intermediates (fused ~1.5C, x-cast ~1C, slices/temps ~1.5C)."""
    x_tile = C * thw * x_itemsize
    f32_work = 4 * C * thw * 4
    budget = 4 * x_tile + f32_work + w_bytes + (4 << 20)     # margin
    # >= 32 MiB (raises v5e's 16 MiB scoped default), <= 56 MiB (v7x 64 MiB physical).
    return int(min(max(budget, 32 << 20), 56 << 20))


@functools.partial(jax.jit, static_argnames=("thw", "dots_in_bf16"))
def sse_forward(x, w1, w2, wr, thw=None, dots_in_bf16=False):
    """x: (N, C, H, W) NCHW (PyTorch convention).
    w1: (C//2, C), w2: (1, C//2), wr: (C, C) — squeezed 1x1-conv weights."""
    N, C, H, W = x.shape
    HW = H * W

    if thw is None:
        thw = _pick_hw_tile(N, HW, C, x.dtype.itemsize)
    # Sanitize user-supplied tiles: last block dim must be a multiple of 128 or == HW.
    if thw != HW and thw % 128 != 0:
        thw = _round_up(thw, 128)
    thw = min(thw, max(HW, _round_up(HW, 128)) if thw % 128 == 0 else HW)
    thw = int(thw)

    # NCHW flattened is already (C, HW) per batch element — no transposes needed.
    x_flat = x.reshape(N, C, HW)

    # Fuse residual + conv1 into one weight; Wr rows first so res = out[:C].
    wcat = jnp.concatenate([wr, w1], axis=0)               # (C + C//2, C)
    if dots_in_bf16:
        wcat = wcat.astype(jnp.bfloat16)
    w2_col = w2.reshape(C // 2, 1).astype(jnp.float32)      # VPU-side weight column

    w_bytes = wcat.size * wcat.dtype.itemsize + w2_col.size * 4
    vmem_limit = _vmem_limit_bytes(C, thw, x.dtype.itemsize, w_bytes)

    out_flat = pl.pallas_call(
        functools.partial(sse_kernel, C=C),
        out_shape=jax.ShapeDtypeStruct((N, C, HW), x.dtype),
        grid_spec=pltpu.PrefetchScalarGridSpec(
            num_scalar_prefetch=0,
            grid=(N, pl.cdiv(HW, thw)),                      # cdiv: no silent tail drop
            in_specs=[
                pl.BlockSpec((None, C, thw), lambda n, t: (n, 0, t)),   # x tile (streamed)
                pl.BlockSpec((C + C // 2, C), lambda n, t: (0, 0)),     # fused Wr|W1 (resident)
                pl.BlockSpec((C // 2, 1), lambda n, t: (0, 0)),         # conv2 column (resident)
            ],
            out_specs=pl.BlockSpec((None, C, thw), lambda n, t: (n, 0, t)),
        ),
        compiler_params=pltpu.CompilerParams(
            dimension_semantics=("parallel", "parallel"),
            vmem_limit_bytes=vmem_limit,
        ),
    )(x_flat, wcat, w2_col)

    return out_flat.reshape(N, C, H, W)


def sse_ref(x, w1, w2, wr):
    """Pure-JAX reference of the PyTorch sSE forward (NCHW)."""
    y = jnp.maximum(jnp.einsum("oc,nchw->nohw", w1, x), 0.0)
    y = jax.nn.sigmoid(jnp.einsum("oc,nchw->nohw", w2, y))
    res = jnp.einsum("oc,nchw->nohw", wr, x)
    return x * y + res


def _make_weights(key, C, dtype=jnp.float32):
    k1, k2, kr = jax.random.split(key, 3)
    w1 = jax.random.normal(k1, (C // 2, C), dtype=dtype) * 0.5    # conv1 weight
    w2 = jax.random.normal(k2, (1, C // 2), dtype=dtype) * 0.5    # conv2 weight
    wr = jax.random.normal(kr, (C, C), dtype=dtype) * 0.5         # residual weight
    return w1, w2, wr


if __name__ == "__main__":
    key = jax.random.PRNGKey(0)
    kx, kw, kx2, kw2 = jax.random.split(key, 4)

    # Main shape from the module spec.
    N, C, H, W = 2, 4, 16, 16
    x = jax.random.normal(kx, (N, C, H, W), dtype=jnp.float32)
    w1, w2, wr = _make_weights(kw, C)
    ref = jax.block_until_ready(sse_ref(x, w1, w2, wr))

    # Explicit tile: exercises the HW-tiled grid (grid = (2, 2)).
    out_tiled = jax.block_until_ready(sse_forward(x, w1, w2, wr, thw=128))
    if not jnp.allclose(out_tiled, ref, atol=1e-4, rtol=1e-4):
        raise AssertionError("Pallas sSE output (tiled) does not match reference")

    # Auto-picked tile.
    out_auto = jax.block_until_ready(sse_forward(x, w1, w2, wr))
    if not jnp.allclose(out_auto, ref, atol=1e-4, rtol=1e-4):
        raise AssertionError("Pallas sSE output (auto tile) does not match reference")

    # Non-128-aligned spatial extent: exercises cdiv grid + masked partial last block.
    N2, C2, H2, W2 = 1, 8, 20, 20
    x2 = jax.random.normal(kx2, (N2, C2, H2, W2), dtype=jnp.float32)
    w1b, w2b, wrb = _make_weights(kw2, C2)
    ref2 = jax.block_until_ready(sse_ref(x2, w1b, w2b, wrb))
    out2 = jax.block_until_ready(sse_forward(x2, w1b, w2b, wrb, thw=128))
    if not jnp.allclose(out2, ref2, atol=1e-4, rtol=1e-4):
        raise AssertionError("Pallas sSE output (remainder tiles) does not match reference")

    # Optional bf16 matmul path (f32 accumulation) — looser tolerance.
    out_bf16 = jax.block_until_ready(sse_forward(x, w1, w2, wr, dots_in_bf16=True))
    if not jnp.allclose(out_bf16, ref, atol=5e-2, rtol=5e-2):
        raise AssertionError("Pallas sSE output (bf16 dots) does not match reference")

    print("KERNEL_OK")
</pallas_src>

<mosaic_0001>
module attributes {stable_mosaic.version = 11 : i64} {
  func.func @sse_kernel(%arg0: i32, %arg1: i32, %arg2: memref<1x4x128xf32, #tpu.memory_space<vmem>>, %arg3: memref<6x4xf32, #tpu.memory_space<vmem>>, %arg4: memref<2x1xf32, #tpu.memory_space<vmem>>, %arg5: memref<1x4x128xf32, #tpu.memory_space<vmem>>) attributes {dimension_semantics = [#tpu.dimension_semantics<parallel>, #tpu.dimension_semantics<parallel>], iteration_bounds = array<i64: 2, 2>, scalar_prefetch = 0 : i64, scratch_operands = 0 : i64, tpu.core_type = #tpu.core_type<tc>, window_params = [{transform_indices = @transform_0, window_bounds = array<i64: 1, 4, 128>}, {pipeline_mode = #tpu.pipeline_mode<synchronous>, transform_indices = @transform_1, window_bounds = array<i64: 6, 4>}, {pipeline_mode = #tpu.pipeline_mode<synchronous>, transform_indices = @transform_2, window_bounds = array<i64: 2, 1>}, {transform_indices = @transform_3, window_bounds = array<i64: 1, 4, 128>}]} {
    %c0 = arith.constant 0 : index
    %c0_0 = arith.constant 0 : index
    %c0_1 = arith.constant 0 : index
    %0 = vector.load %arg2[%c0, %c0_0, %c0_1] : memref<1x4x128xf32, #tpu.memory_space<vmem>>, vector<1x4x128xf32>
    %1 = vector.shape_cast %0 : vector<1x4x128xf32> to vector<4x128xf32>
    %c0_2 = arith.constant 0 : index
    %c0_3 = arith.constant 0 : index
    %2 = vector.load %arg3[%c0_2, %c0_3] : memref<6x4xf32, #tpu.memory_space<vmem>>, vector<6x4xf32>
    %cst = arith.constant dense<0.000000e+00> : vector<6x128xf32>
    %3 = tpu.matmul %2, %1, %cst {dimension_numbers = #tpu.dot_dimension_numbers<[1], [0], [0], [1], [0, 0, 1, 1], [], []>} : vector<6x4xf32>, vector<4x128xf32>, vector<6x128xf32> -> vector<6x128xf32>
    %4 = vector.extract_strided_slice %3 {offsets = [0, 0], sizes = [4, 128], strides = [1, 1]} : vector<6x128xf32> to vector<4x128xf32>
    %5 = vector.extract_strided_slice %3 {offsets = [4, 0], sizes = [2, 128], strides = [1, 1]} : vector<6x128xf32> to vector<2x128xf32>
    %cst_4 = arith.constant 0.000000e+00 : f32
    %6 = vector.broadcast %cst_4 : f32 to vector<2x128xf32>
    %7 = arith.maximumf %5, %6 : vector<2x128xf32>
    %c0_5 = arith.constant 0 : index
    %c0_6 = arith.constant 0 : index
    %8 = vector.load %arg4[%c0_5, %c0_6] : memref<2x1xf32, #tpu.memory_space<vmem>>, vector<2x1xf32>
    %9 = vector.broadcast %8 : vector<2x1xf32> to vector<2x128xf32>
    %10 = arith.mulf %7, %9 : vector<2x128xf32>
    %cst_7 = arith.constant dense<0.000000e+00> : vector<128xf32>
    %11 = vector.multi_reduction <add>, %10, %cst_7 [0] : vector<2x128xf32> to vector<128xf32>
    %12 = vector.shape_cast %11 : vector<128xf32> to vector<1x128xf32>
    %cst_8 = arith.constant 0.000000e+00 : f32
    %13 = vector.broadcast %cst_8 : f32 to vector<1x128xf32>
    %14 = arith.subf %13, %12 : vector<1x128xf32>
    %15 = math.exp %14 : vector<1x128xf32>
    %cst_9 = arith.constant 1.000000e+00 : f32
    %16 = vector.broadcast %cst_9 : f32 to vector<1x128xf32>
    %17 = arith.addf %16, %15 : vector<1x128xf32>
    %cst_10 = arith.constant 1.000000e+00 : f32
    %18 = vector.broadcast %cst_10 : f32 to vector<1x128xf32>
    %19 = arith.divf %18, %17 : vector<1x128xf32>
    %20 = vector.broadcast %19 : vector<1x128xf32> to vector<4x128xf32>
    %21 = arith.mulf %1, %20 : vector<4x128xf32>
    %22 = arith.addf %21, %4 : vector<4x128xf32>
    %c0_11 = arith.constant 0 : index
    %c0_12 = arith.constant 0 : index
    %c0_13 = arith.constant 0 : index
    %23 = vector.load %arg5[%c0_11, %c0_12, %c0_13] : memref<1x4x128xf32, #tpu.memory_space<vmem>>, vector<1x4x128xf32>
    %24 = vector.shape_cast %23 : vector<1x4x128xf32> to vector<4x128xf32>
    %25 = vector.shape_cast %22 : vector<4x128xf32> to vector<1x4x128xf32>
    tpu.vector_store %arg5[%c0_11, %c0_12, %c0_13], %25 {strides = array<i32>} : memref<1x4x128xf32, #tpu.memory_space<vmem>>, vector<1x4x128xf32>,
    return
  }
  func.func @transform_0(%arg0: i32, %arg1: i32) -> (i32, i32, i32) {
    %c0_i32 = arith.constant 0 : i32
    %c0_i32_0 = arith.constant 0 : i32
    return %arg0, %c0_i32, %arg1 : i32, i32, i32
  }
  func.func @transform_1(%arg0: i32, %arg1: i32) -> (i32, i32) {
    %c0_i32 = arith.constant 0 : i32
    %c0_i32_0 = arith.constant 0 : i32
    %c0_i32_1 = arith.constant 0 : i32
    return %c0_i32, %c0_i32_0 : i32, i32
  }
  func.func @transform_2(%arg0: i32, %arg1: i32) -> (i32, i32) {
    %c0_i32 = arith.constant 0 : i32
    %c0_i32_0 = arith.constant 0 : i32
    %c0_i32_1 = arith.constant 0 : i32
    return %c0_i32, %c0_i32_0 : i32, i32
  }
  func.func @transform_3(%arg0: i32, %arg1: i32) -> (i32, i32, i32) {
    %c0_i32 = arith.constant 0 : i32
    %c0_i32_0 = arith.constant 0 : i32
    return %arg0, %c0_i32, %arg1 : i32, i32, i32
  }
}

</mosaic_0001>

<llo_original>
// kernel: sse_forward.1
$region0: #{sse_forward.1}
  #allocation0 [shape = 'u32[]', space=smem, size = 0x4, offset = 0x4, fixed_abs, tag = 'smem constant byte address 0x4 - core index']
  #allocation1 [shape = 'u32[144,128]{1,0:T(1,128)}', space=vmem, size = 0x12000, scoped, tag = 'internal scratch']
  %s0 = inlined_call_operand.vmem [shape: f32[2,4,256], index: 0, kind: input, shape index: {}]
  %s1 = inlined_call_operand.vmem [shape: f32[6,4], index: 1, kind: input, shape index: {}]
  %s2 = inlined_call_operand.vmem [shape: f32[2,1], index: 2, kind: input, shape index: {}]
  %s3 = inlined_call_operand.vmem [shape: f32[2,4,256], index: 3, kind: output, shape index: {}]
  %s4 = sld [smem:[#allocation0]]
  $region45: #{sse_forward.1} parent=0
    _
  %s6 = ssub.s32 1, %s4
  %s7 = scalar_select 0, %s6, %s4
  loop: start=0, step=1, limit=6
  $region2: #{sse_forward.1} parent=0 // loop_pre_header
    _
  $region3: #{sse_forward.1} parent=0 // loop_header
    %s9 = sphi 0, %s13
    %p10 = scmp.ge.s32.totalorder %s9, 6
    %s16 = sphi 0, %s28
    %s17 = sphi 0, %s24
    %s18 = sphi 0, %s16
    %s19 = sphi 0, %s17
    %s20 = sphi 0, %s18
    %s21 = sphi 0, %s19
    %s33 = sphi 0, %s35
    %s36 = sphi 0, %s33
    %s37 = sphi 0, %s36
    %s53 = sphi 0, %s37
    %s57 = sphi 0, %s57
    %s59 = sphi 0, %s57
    %s60 = sphi 0, %s59
    %s74 = sphi 0, %s60
    %s78 = sphi 0, %s78
    %s80 = sphi 0, %s78
    %s81 = sphi 0, %s80
    %s95 = sphi 0, %s81
    %s103 = sphi 0, %s105
    %s106 = sphi 0, %s103
    %s107 = sphi 0, %s106
    %s123 = sphi 0, %s107
  $region4: #{sse_forward.1} parent=0 // loop_header_branch
    %12 = sbr.rel (%p10) target = $region8
  $region5: #{sse_forward.1} parent=0 // loop_body
    %s14 = ssub.s32 %s9, 1
    %s15 = ssub.s32 %s9, 2
    %s22 = sadd.s32 1, %s17
    %p23 = scmp.ge.s32.totalorder %s22, 2
    %s24 = scalar_select %p23, 0, %s22
    %s25 = sadd.s32 1, %s16
    %s26 = scalar_select %p23, %s25, %s16
    %p27 = scmp.ge.s32.totalorder %s26, 2
    %s28 = scalar_select %p27, 0, %s26
    %s29 = ssub.s32 %s16, %s28
    %s30 = ssub.s32 %s17, %s24
    %s31 = sor.u32 %s29, %s30
    %p32 = scmp.eq.s32.totalorder %s31, 0
    %s34 = sadd.s32 %s33, 1
    %s35 = scalar_select %p32, %s33, %s34
    %p38 = pneg %p32
    %p39 = scmp.eq.s32.totalorder %s9, 3
    %p40 = por %p38, %p39
    %p41 = scmp.ne.s32.totalorder %s33, %s36
    %p42 = scmp.eq.s32.totalorder %s9, 0
    %p43 = por %p41, %p42
    %p44 = scmp.ne.s32.totalorder %s33, %s36
    %p45 = scmp.eq.s32.totalorder %s14, 3
    %p46 = por %p44, %p45
    %p47 = scmp.ne.s32.totalorder %s36, %s37
    %p48 = scmp.eq.s32.totalorder %s14, 0
    %p49 = por %p47, %p48
    %p50 = scmp.ne.s32.totalorder %s36, %s37
    %p51 = scmp.eq.s32.totalorder %s15, 3
    %p52 = por %p50, %p51
    %p54 = scmp.ne.s32.totalorder %s37, %s53
    %p55 = scmp.eq.s32.totalorder %s15, 0
    %p56 = por %p54, %p55
    %s58 = sadd.s32 %s57, 1
    %p61 = scmp.eq.s32.totalorder %s9, 3
    %p62 = scmp.ne.s32.totalorder %s57, %s59
    %p63 = scmp.eq.s32.totalorder %s9, 0
    %p64 = por %p62, %p63
    %p65 = scmp.ne.s32.totalorder %s57, %s59
    %p66 = scmp.eq.s32.totalorder %s14, 3
    %p67 = por %p65, %p66
    %p68 = scmp.ne.s32.totalorder %s59, %s60
    %p69 = scmp.eq.s32.totalorder %s14, 0
    %p70 = por %p68, %p69
    %p71 = scmp.ne.s32.totalorder %s59, %s60
    %p72 = scmp.eq.s32.totalorder %s15, 3
    %p73 = por %p71, %p72
    %p75 = scmp.ne.s32.totalorder %s60, %s74
    %p76 = scmp.eq.s32.totalorder %s15, 0
    %p77 = por %p75, %p76
    %s79 = sadd.s32 %s78, 1
    %p82 = scmp.eq.s32.totalorder %s9, 3
    %p83 = scmp.ne.s32.totalorder %s78, %s80
    %p84 = scmp.eq.s32.totalorder %s9, 0
    %p85 = por %p83, %p84
    %p86 = scmp.ne.s32.totalorder %s78, %s80
    %p87 = scmp.eq.s32.totalorder %s14, 3
    %p88 = por %p86, %p87
    %p89 = scmp.ne.s32.totalorder %s80, %s81
    %p90 = scmp.eq.s32.totalorder %s14, 0
    %p91 = por %p89, %p90
    %p92 = scmp.ne.s32.totalorder %s80, %s81
    %p93 = scmp.eq.s32.totalorder %s15, 3
    %p94 = por %p92, %p93
    %p96 = scmp.ne.s32.totalorder %s81, %s95
    %p97 = scmp.eq.s32.totalorder %s15, 0
    %p98 = por %p96, %p97
    %s99 = ssub.s32 %s16, %s28
    %s100 = ssub.s32 %s17, %s24
    %s101 = sor.u32 %s99, %s100
    %p102 = scmp.eq.s32.totalorder %s101, 0
    %s104 = sadd.s32 %s103, 1
    %s105 = scalar_select %p102, %s103, %s104
    %p108 = pneg %p102
    %p109 = scmp.eq.s32.totalorder %s9, 3
    %p110 = por %p108, %p109
    %p111 = scmp.ne.s32.totalorder %s103, %s106
    %p112 = scmp.eq.s32.totalorder %s9, 0
    %p113 = por %p111, %p112
    %p114 = scmp.ne.s32.totalorder %s103, %s106
    %p115 = scmp.eq.s32.totalorder %s14, 3
    %p116 = por %p114, %p115
    %p117 = scmp.ne.s32.totalorder %s106, %s107
    %p118 = scmp.eq.s32.totalorder %s14, 0
    %p119 = por %p117, %p118
    %p120 = scmp.ne.s32.totalorder %s106, %s107
    %p121 = scmp.eq.s32.totalorder %s15, 3
    %p122 = por %p120, %p121
    %p124 = scmp.ne.s32.totalorder %s107, %s123
    %p125 = scmp.eq.s32.totalorder %s15, 0
    %p126 = por %p124, %p125
    %p127 = scmp.le.s32.totalorder 1, %s9
    %p128 = scmp.lt.s32.totalorder %s9, 5
    %p129 = pnand %p127, %p128
    %p130 = pneg %p129
    // Predicated region
    $region9: #{sse_forward.1} parent=5 // pred_check
      _
    $region10: #{sse_forward.1} parent=5 // pred_check_branch
      %132 = sbr.rel (%p129) target = $region12
    $region11: #{sse_forward.1} parent=5 // pred_region
      %s133 = ssub.s32 %s9, 1
      // Predicated region
      $region13: #{sse_forward.1} parent=11 // pred_check
        %p134 = pneg %p70
      $region14: #{sse_forward.1} parent=11 // pred_check_branch
        %136 = sbr.rel (%p134) target = $region16
      $region15: #{sse_forward.1} parent=11 // pred_region
        _
      $region16: #{sse_forward.1} parent=11 // pred_fallthru
        _
      // Predicated region
      $region17: #{sse_forward.1} parent=11 // pred_check
        %p137 = pneg %p91
      $region18: #{sse_forward.1} parent=11 // pred_check_branch
        %139 = sbr.rel (%p137) target = $region20
      $region19: #{sse_forward.1} parent=11 // pred_region
        _
      $region20: #{sse_forward.1} parent=11 // pred_fallthru
        _
    $region12: #{sse_forward.1} parent=5 // pred_fallthru
      _
    %p140 = scmp.lt.s32.totalorder %s9, 4
    // Predicated region
    $region21: #{sse_forward.1} parent=5 // pred_check
      %p141 = pneg %p140
    $region22: #{sse_forward.1} parent=5 // pred_check_branch
      %143 = sbr.rel (%p141) target = $region24
    $region23: #{sse_forward.1} parent=5 // pred_region
      // Predicated region
      $region25: #{sse_forward.1} parent=23 // pred_check
        %p144 = pneg %p43
      $region26: #{sse_forward.1} parent=23 // pred_check_branch
        %146 = sbr.rel (%p144) target = $region28
      $region27: #{sse_forward.1} parent=23 // pred_region
        %p147 = scmp.lt.s32.totalorder %s16, 1
        %s148 = scalar_select %p147, %s16, 1
        %p149 = scmp.lt.s32.totalorder %s17, 1
        %s150 = scalar_select %p149, %s17, 1
        %s151 = smul.addr %s148, 2
        %s152 = sadd.s32 %s150, %s151
        %s153 = smul.addr %s152, 4
        %s154 = scalar_lea.vmem %s0, %s153
      $region28: #{sse_forward.1} parent=23 // pred_fallthru
        _
    $region24: #{sse_forward.1} parent=5 // pred_fallthru
      _
    %p155 = scmp.le.s32.totalorder 1, %s9
    %p156 = scmp.lt.s32.totalorder %s9, 5
    %p157 = pnand %p155, %p156
    %p158 = pneg %p157
    // Predicated region
    $region29: #{sse_forward.1} parent=5 // pred_check
      _
    $region30: #{sse_forward.1} parent=5 // pred_check_branch
      %160 = sbr.rel (%p157) target = $region32
    $region31: #{sse_forward.1} parent=5 // pred_region
      %s161 = ssub.s32 %s9, 1
      %p162 = scmp.lt.s32.totalorder %s18, 1
      %s163 = scalar_select %p162, %s18, 1
      %p164 = scmp.lt.s32.totalorder %s19, 1
      %s165 = scalar_select %p164, %s19, 1
      %s166 = smul.addr %s163, 2
      %s167 = sadd.s32 %s165, %s166
      %s168 = smul.addr %s167, 4
      %s169 = scalar_lea.vmem %s0, %s168
      %p170 = pneg %p49
      %p171 = pneg %p46
      %p172 = pneg %p70
      %p173 = pneg %p67
      %p174 = pneg %p91
      %p175 = pneg %p88
      %p176 = pneg %p119
      %p177 = pneg %p116
      %p178 = scmp.lt.s32.totalorder %s18, 1
      %s179 = scalar_select %p178, %s18, 1
      %p180 = scmp.lt.s32.totalorder %s19, 1
      %s181 = scalar_select %p180, %s19, 1
      %s182 = smul.addr %s179, 2
      %s183 = sadd.s32 %s181, %s182
      %s184 = smul.addr %s183, 4
      %s185 = scalar_lea.vmem %s3, %s184
      %p186 = scmp.lt.s32.totalorder %s18, 1
      %s187 = scalar_select %p186, %s18, 1
      %p188 = scmp.lt.s32.totalorder %s19, 1
      %s189 = scalar_select %p188, %s19, 1
      %s190 = smul.addr %s187, 2
      %s191 = sadd.s32 %s189, %s190
      %s192 = smul.addr %s191, 4
      %s193 = scalar_lea.vmem %s0, %s192
      %p194 = scmp.lt.s32.totalorder %s18, 1
      %s195 = scalar_select %p194, %s18, 1
      %p196 = scmp.lt.s32.totalorder %s19, 1
      %s197 = scalar_select %p196, %s19, 1
      %s198 = smul.addr %s195, 2
      %s199 = sadd.s32 %s197, %s198
      %s200 = smul.addr %s199, 4
      %s201 = scalar_lea.vmem %s3, %s200
      %v202 = vld [vmem:[%s193] sm:$0xf]
      %v203 = vld [vmem:[%s1] sm:$0x3f]
      %vm204 = vcmask 31744
      %v206 = vsel %vm204, %v203, 0
      %vm208 = vcmask 1043456
      %v210 = vsel %vm208, %v202, 0
      %212 = vmatprep.subr.mxu0 0.0
      %213 = vmatpush1.msra.mxu0 %v210
      %214 = vmatprep.subr.mxu0 0.0
      %215 = vmatpush1.msra.mxu0 0.0
      %216 = vmatprep.subr.mxu0 0.0
      %217 = vmatpush1.msra.mxu0 0.0
      %218 = vmatprep.subr.mxu0 0.0
      %219 = vmatpush1.msra.mxu0 0.0
      %220 = vmatprep.subr.mxu0 0.0
      %221 = vmatpush1.msra.mxu0 0.0
      %222 = vmatprep.subr.mxu0 0.0
      %223 = vmatpush1.msra.mxu0 0.0
      %224 = vmatprep.subr.mxu0 0.0
      %225 = vmatpush1.msra.mxu0 0.0
      %226 = vmatprep.subr.mxu0 0.0
      %227 = vmatpush1.msra.mxu0 0.0
      %228 = vmatprep.subr.mxu0 0.0
      %229 = vmatpush1.msra.mxu0 0.0
      %230 = vmatprep.subr.mxu0 0.0
      %231 = vmatpush1.msra.mxu0 0.0
      %232 = vmatprep.subr.mxu0 0.0
      %233 = vmatpush1.msra.mxu0 0.0
      %234 = vmatprep.subr.mxu0 0.0
      %235 = vmatpush1.msra.mxu0 0.0
      %236 = vmatprep.subr.mxu0 0.0
      %237 = vmatpush1.msra.mxu0 0.0
      %238 = vmatprep.subr.mxu0 0.0
      %239 = vmatpush1.msra.mxu0 0.0
      %240 = vmatprep.subr.mxu0 0.0
      %241 = vmatpush1.msra.mxu0 0.0
      %242 = vmatprep.subr.mxu0 0.0
      %243 = vmatpush1.msra.mxu0 0.0
      %244 = vmatprep.subr.mxu0 0.0
      %245 = vmatpush1.msra.mxu0 0.0
      %246 = vmatprep.subr.mxu0 0.0
      %247 = vmatpush1.msra.mxu0 0.0
      %248 = vmatprep.subr.mxu0 0.0
      %249 = vmatpush1.msra.mxu0 0.0
      %250 = vmatprep.subr.mxu0 0.0
      %251 = vmatpush1.msra.mxu0 0.0
      %252 = vmatprep.subr.mxu0 0.0
      %253 = vmatpush1.msra.mxu0 0.0
      %254 = vmatprep.subr.mxu0 0.0
      %255 = vmatpush1.msra.mxu0 0.0
      %256 = vmatprep.subr.mxu0 0.0
      %257 = vmatpush1.msra.mxu0 0.0
      %258 = vmatprep.subr.mxu0 0.0
      %259 = vmatpush1.msra.mxu0 0.0
      %260 = vmatprep.subr.mxu0 0.0
      %261 = vmatpush1.msra.mxu0 0.0
      %262 = vmatprep.subr.mxu0 0.0
      %263 = vmatpush1.msra.mxu0 0.0
      %264 = vmatprep.subr.mxu0 0.0
      %265 = vmatpush1.msra.mxu0 0.0
      %266 = vmatprep.subr.mxu0 0.0
      %267 = vmatpush1.msra.mxu0 0.0
      %268 = vmatprep.subr.mxu0 0.0
      %269 = vmatpush1.msra.mxu0 0.0
      %270 = vmatprep.subr.mxu0 0.0
      %271 = vmatpush1.msra.mxu0 0.0
      %272 = vmatprep.subr.mxu0 0.0
      %273 = vmatpush1.msra.mxu0 0.0
      %274 = vmatprep.subr.mxu0 0.0
      %275 = vmatpush1.msra.mxu0 0.0
      %276 = vmatprep.mubr.f32.mxu0 0.0
      %277 = vmatmul.mubr.f32.gmra.mrb[0].mxu0 %v206
      %v278 = vpop.f32.mrb[0].mxu0
      %v279 = vadd.f32 0.0, %v278
      %v280 = vpop.f32.mrb[0].mxu0
      %281 = vdwg.mxu0
      %v282 = vmax.f32 %v279, 0.0
      %v283 = vld [vmem:[%s2] sm:$0x3]
      %285 = vset.pattern.permute.xlu0 0
      %286 = vperm.xlu0 %285, %v283
      %v287 = vpop.permute.xlu0 %286
      %v288 = vrot.slane %v287, 4
      %v290 = vmul.f32 %v282, %v288
      %v292 = vrot.slane %v290, 4
      %vm294 = vcmask 1041408
      %v295 = vsel %vm294, %v292, 0.0
      %v296 = vrot.slane %v295, 4
      %v297 = vadd.f32 %v295, %v296
      %v298 = vrot.slane %v297, 2
      %v299 = vadd.f32 %v297, %v298
      %v300 = vrot.slane %v299, 1
      %v301 = vadd.f32 %v299, %v300
      %v302 = vsub.f32 0.0, %v301
      %v303 = vmul.f32 %v302, 1.442695
      %v304 = vpow.pop %v303
      %v305 = vadd.f32 %v304, 1.0
      %v306 = vrcp.pop %v305
      %v307 = vmul.f32 1.0, %v306
      %v308 = vmul.f32 %v202, %v307
      %v309 = vadd.f32 %v308, %v279
      %310 = vst [vmem:[%s201] sm:$0xf] %v309
      %p311 = scmp.lt.s32.totalorder %s18, 1
      %s312 = scalar_select %p311, %s18, 1
      %p313 = scmp.lt.s32.totalorder %s19, 1
      %s314 = scalar_select %p313, %s19, 1
      %s315 = smul.addr %s312, 2
      %s316 = sadd.s32 %s314, %s315
      %s317 = smul.addr %s316, 4
      %s318 = scalar_lea.vmem %s3, %s317
      // Predicated region
      $region33: #{sse_forward.1} parent=31 // pred_check
        %p319 = pneg %p116
      $region34: #{sse_forward.1} parent=31 // pred_check_branch
        %321 = sbr.rel (%p319) target = $region36
      $region35: #{sse_forward.1} parent=31 // pred_region
        _
      $region36: #{sse_forward.1} parent=31 // pred_fallthru
        _
    $region32: #{sse_forward.1} parent=5 // pred_fallthru
      _
    %p322 = scmp.le.s32.totalorder 2, %s9
    // Predicated region
    $region37: #{sse_forward.1} parent=5 // pred_check
      %p323 = pneg %p322
    $region38: #{sse_forward.1} parent=5 // pred_check_branch
      %325 = sbr.rel (%p323) target = $region40
    $region39: #{sse_forward.1} parent=5 // pred_region
      %s326 = ssub.s32 %s9, 2
      // Predicated region
      $region41: #{sse_forward.1} parent=39 // pred_check
        %p327 = pneg %p122
      $region42: #{sse_forward.1} parent=39 // pred_check_branch
        %329 = sbr.rel (%p327) target = $region44
      $region43: #{sse_forward.1} parent=39 // pred_region
        %p330 = scmp.lt.s32.totalorder %s20, 1
        %s331 = scalar_select %p330, %s20, 1
        %p332 = scmp.lt.s32.totalorder %s21, 1
        %s333 = scalar_select %p332, %s21, 1
        %s334 = smul.addr %s331, 2
        %s335 = sadd.s32 %s333, %s334
        %s336 = smul.addr %s335, 4
        %s337 = scalar_lea.vmem %s3, %s336
      $region44: #{sse_forward.1} parent=39 // pred_fallthru
        _
    $region40: #{sse_forward.1} parent=5 // pred_fallthru
      _
  $region6: #{sse_forward.1} parent=0 // loop_footer
    %s13 = sadd.s32 1, %s9
  $region7: #{sse_forward.1} parent=0 // loop_footer_branch
    %8 = sbr.rel target = $region3
  $region8: #{sse_forward.1} parent=0 // loop_exit
    _

</llo_original>
